<compile_context>
chip_gen: v5e
topology: v5e:2x2
jax: 0.10.0
libtpu: 0.0.40
codegen_flags: <defaults>
</compile_context>

<pallas_src>
import functools

import jax
import jax.numpy as jnp
from jax import lax
from jax.experimental import pallas as pl
from jax.experimental.pallas import tpu as pltpu

_IN_EPS = 1e-5     # nn.InstanceNorm2d default eps
_L2_EPS = 1e-12    # F.normalize default eps

_LANE = 128
_MIB = 1024 * 1024


def _tpu_vmem_bytes():
    """Physical per-core VMEM (64 MiB on v7x, 128 MiB on v5e/v6e)."""
    try:
        cap = int(getattr(pltpu.get_tpu_info(), "vmem_capacity_bytes", 0))
        if cap > 0:
            return cap
    except Exception:
        pass
    return 64 * _MIB   # conservative (v7x-sized) fallback


# --------------------------------------------------------------------------
# Path 1: fused single pass (whole per-batch slab in VMEM, batch-blocked)
# --------------------------------------------------------------------------
def _fused_kernel(x_ref, w_ref, b_ref, o_ref):
    # x_ref: (Bt, C, HW) lane-dense block; w_ref/b_ref: (C, 1)
    # TODO(synk): on v6e/v7x with bf16 inputs, keep this per-element chain in
    # bf16 (statistics stay f32) to halve VALU-slot and vreg pressure.
    x = x_ref[...].astype(jnp.float32)
    hw = x.shape[-1]
    inv_hw = 1.0 / hw

    # InstanceNorm2d stats over the spatial axis (centered two-pass form).
    mean = jnp.sum(x, axis=-1, keepdims=True) * inv_hw            # (Bt, C, 1)
    centered = x - mean
    sq = centered * centered
    var = jnp.sum(sq, axis=-1, keepdims=True) * inv_hw            # (Bt, C, 1)
    inv_std = lax.rsqrt(var + _IN_EPS)                            # (Bt, C, 1)

    # ||xn||^2 over channels with xn = centered * inv_std (never materialized).
    norm_sq = jnp.sum(sq * (inv_std * inv_std), axis=1, keepdims=True)   # (Bt, 1, HW)
    inv_norm = lax.rsqrt(jnp.maximum(norm_sq, _L2_EPS * _L2_EPS))        # (Bt, 1, HW)

    w = w_ref[...].astype(jnp.float32)[None]                      # (1, C, 1)
    b = b_ref[...].astype(jnp.float32)[None]                      # (1, C, 1)
    o_ref[...] = (centered * (inv_std * w) * inv_norm + b).astype(o_ref.dtype)


def _domain_norm2_fused(x3, w2, b2, bt, vmem_limit):
    B, C, HW = x3.shape
    return pl.pallas_call(
        _fused_kernel,
        out_shape=jax.ShapeDtypeStruct((B, C, HW), x3.dtype),
        grid_spec=pltpu.PrefetchScalarGridSpec(
            num_scalar_prefetch=0,
            grid=(B // bt,),
            in_specs=[
                pl.BlockSpec((bt, C, HW), lambda i: (i, 0, 0)),
                pl.BlockSpec((C, 1), lambda i: (0, 0)),
                pl.BlockSpec((C, 1), lambda i: (0, 0)),
            ],
            out_specs=pl.BlockSpec((bt, C, HW), lambda i: (i, 0, 0)),
        ),
        compiler_params=pltpu.CompilerParams(
            dimension_semantics=("parallel",),
            vmem_limit_bytes=vmem_limit,
        ),
    )(x3, w2, b2)


# --------------------------------------------------------------------------
# Path 2: spatially tiled two-phase (stats pass + apply pass) for large H*W
# --------------------------------------------------------------------------
def _dn2_stats_kernel(x_ref, sum_ref, sumsq_ref, acc_s, acc_sq, *, hw, hw_tile):
    # x_ref: (1, C, hw_tile) tile.  sum_ref/sumsq_ref: (1, 1, C, 1) blocks of
    # the (B, NSUP, C, 1) partial-sum outputs.  acc_s/acc_sq: (C, hw_tile) f32
    # lane-parallel accumulators (VMEM scratch, persistent across grid steps).
    s = pl.program_id(1)
    t = pl.program_id(2)
    nt = pl.num_programs(2)

    @pl.when(t == 0)
    def _():
        acc_s[...] = jnp.zeros_like(acc_s)
        acc_sq[...] = jnp.zeros_like(acc_sq)

    x = x_ref[0].astype(jnp.float32)                       # (C, hw_tile)
    if hw % hw_tile != 0:
        # Ragged tail: zero out-of-bounds columns (their block contents are
        # unspecified) so they contribute nothing to sum / sumsq.
        col0 = (s * nt + t) * hw_tile
        col = col0 + lax.broadcasted_iota(jnp.int32, x.shape, 1)
        x = jnp.where(col < hw, x, 0.0)

    # Pure-VPU accumulation per tile; the cross-lane (XLU) reduction happens
    # only once per (batch, super-chunk), at the last tile.
    acc_s[...] += x
    acc_sq[...] += x * x

    @pl.when(t == nt - 1)
    def _():
        sum_ref[...] = jnp.sum(acc_s[...], axis=-1,
                               keepdims=True).reshape(sum_ref.shape)
        sumsq_ref[...] = jnp.sum(acc_sq[...], axis=-1,
                                 keepdims=True).reshape(sumsq_ref.shape)


def _dn2_apply_kernel(x_ref, mean_ref, istd_ref, w_ref, b_ref, o_ref):
    # x_ref: (1, C, hw_tile); mean/istd: (1, C, 1) f32; w/b: (C, 1).
    # TODO(synk): on v6e/v7x with bf16 inputs keep this per-element chain in bf16.
    x = x_ref[...].astype(jnp.float32)
    xn = (x - mean_ref[...]) * istd_ref[...]               # instance-normalized
    norm_sq = jnp.sum(xn * xn, axis=1, keepdims=True)      # (1, 1, hw_tile)
    inv_norm = lax.rsqrt(jnp.maximum(norm_sq, _L2_EPS * _L2_EPS))
    w = w_ref[...].astype(jnp.float32)[None]               # (1, C, 1)
    b = b_ref[...].astype(jnp.float32)[None]
    o_ref[...] = (xn * inv_norm * w + b).astype(o_ref.dtype)


def _domain_norm2_tiled(x3, w2, b2, hw_tile, vmem_limit):
    B, C, HW = x3.shape
    T = pl.cdiv(HW, hw_tile)
    # Two parallel spatial super-chunks (use both TensorCores on v7x even at
    # B == 1) whenever the tile count splits evenly; partials merged below.
    nsup = 2 if (T >= 2 and T % 2 == 0) else 1
    t_per = T // nsup

    def _x_stats_index(b, s, t):
        return (b, 0, s * t_per + t)

    part_sum, part_sumsq = pl.pallas_call(
        functools.partial(_dn2_stats_kernel, hw=HW, hw_tile=hw_tile),
        out_shape=(jax.ShapeDtypeStruct((B, nsup, C, 1), jnp.float32),
                   jax.ShapeDtypeStruct((B, nsup, C, 1), jnp.float32)),
        grid_spec=pltpu.PrefetchScalarGridSpec(
            num_scalar_prefetch=0,
            grid=(B, nsup, t_per),
            in_specs=[pl.BlockSpec((1, C, hw_tile), _x_stats_index)],
            out_specs=[pl.BlockSpec((1, 1, C, 1), lambda b, s, t: (b, s, 0, 0)),
                       pl.BlockSpec((1, 1, C, 1), lambda b, s, t: (b, s, 0, 0))],
            scratch_shapes=[pltpu.VMEM((C, hw_tile), jnp.float32),
                            pltpu.VMEM((C, hw_tile), jnp.float32)],
        ),
        compiler_params=pltpu.CompilerParams(
            dimension_semantics=("parallel", "parallel", "arbitrary"),
            vmem_limit_bytes=vmem_limit,
        ),
    )(x3)

    # Tiny (B, C, 1) finalization in plain JAX: merge super-chunk partials and
    # do the mean / variance / rsqrt once per (b, c) instead of once per tile.
    sums = jnp.sum(part_sum, axis=1)                       # (B, C, 1)
    sumsqs = jnp.sum(part_sumsq, axis=1)                   # (B, C, 1)
    mean = sums / HW
    # One-pass (E[x^2] - mean^2) biased variance in f32: slight cancellation
    # risk for |mean| >> std, but it avoids a third full HBM pass over x.
    var = jnp.maximum(sumsqs / HW - mean * mean, 0.0)
    inv_std = lax.rsqrt(var + _IN_EPS)

    return pl.pallas_call(
        _dn2_apply_kernel,
        out_shape=jax.ShapeDtypeStruct((B, C, HW), x3.dtype),
        grid_spec=pltpu.PrefetchScalarGridSpec(
            num_scalar_prefetch=0,
            grid=(B, T),
            in_specs=[
                pl.BlockSpec((1, C, hw_tile), lambda b, t: (b, 0, t)),
                pl.BlockSpec((1, C, 1), lambda b, t: (b, 0, 0)),
                pl.BlockSpec((1, C, 1), lambda b, t: (b, 0, 0)),
                pl.BlockSpec((C, 1), lambda b, t: (0, 0)),
                pl.BlockSpec((C, 1), lambda b, t: (0, 0)),
            ],
            out_specs=pl.BlockSpec((1, C, hw_tile), lambda b, t: (b, 0, t)),
        ),
        compiler_params=pltpu.CompilerParams(
            dimension_semantics=("parallel", "parallel"),
            vmem_limit_bytes=vmem_limit,
        ),
    )(x3, mean, inv_std, w2, b2)


# --------------------------------------------------------------------------
# Dispatch wrapper
# --------------------------------------------------------------------------
def _largest_divisor(n, cap):
    cap = max(1, min(n, cap))
    for d in range(cap, 0, -1):
        if n % d == 0:
            return d
    return 1


def _pick_hw_tile(hw, c, target_bytes):
    """Spatial tile width (multiple of 128 lanes) with f32 bytes ~ target."""
    per_col = max(1, c * 4)
    tgt = max(_LANE, (target_bytes // per_col) // _LANE * _LANE)
    hw_up = -(-hw // _LANE) * _LANE
    tgt = min(tgt, hw_up)

    # Prefer an exact divisor of hw near the target (no ragged tail); otherwise
    # fall back to the target width with a masked / dropped ragged last tile.
    best_div = 0
    d = _LANE
    while d <= hw:
        if hw % d == 0 and d <= tgt:
            best_div = d
        d += _LANE
    tile = best_div if best_div >= max(_LANE, tgt // 4) else tgt

    # Nudge toward an even tile count so the stats pass can run two parallel
    # spatial super-chunks (both TensorCores on v7x at batch 1).
    t = -(-hw // tile)
    if t > 1 and t % 2 == 1:
        for cand in (tile + _LANE, tile - _LANE, tile + 2 * _LANE, tile - 2 * _LANE):
            if cand >= _LANE and cand * per_col <= 2 * target_bytes:
                if (-(-hw // cand)) % 2 == 0:
                    return cand
    return tile


def domain_norm2(x, weight, bias, *, force_tiled=False, hw_tile=None):
    """DomainNorm2.forward: InstanceNorm2d(affine=False) -> L2 over C -> x*w + b.

    x: (B, C, H, W); weight/bias: any shape broadcastable to (1, C, 1, 1).
    """
    B, C, H, W = x.shape
    HW = H * W
    x3 = x.reshape(B, C, HW)                 # lane-dense view (free for NCHW)
    w2 = jnp.asarray(weight).reshape(C, 1)   # C on the broadcast (sublane) axis
    b2 = jnp.asarray(bias).reshape(C, 1)
    # TODO(synk): for HW < 128 with C >= 128 a channels-last (B, HW, C) layout
    # would be lane-dense, but only pays off if the producer supplies NHWC.

    vmem_cap = _tpu_vmem_bytes()
    vmem_soft_cap = (vmem_cap * 7) // 8        # headroom for Mosaic scratch
    fused_slab_limit = vmem_cap // 8           # ~8 MiB v7x, ~16 MiB v5e/v6e
    tile_target = max(2 * _MIB, vmem_cap // 24)

    slab_bytes = C * HW * 4                    # one batch element in f32
    want_tiled = force_tiled or slab_bytes > fused_slab_limit

    if want_tiled:
        if hw_tile is None or hw_tile <= 0 or hw_tile % _LANE != 0:
            hw_tile = _pick_hw_tile(HW, C, tile_target)
        out3 = _domain_norm2_tiled(x3, w2, b2, hw_tile, vmem_soft_cap)
    else:
        # Batch-block small slabs to amortize the ~0.35us per-grid-step cost,
        # but keep at least two grid steps when B >= 2 so both TensorCores are
        # used on multi-core chips (v7x).
        byte_cap = max(1, tile_target // max(1, slab_bytes))
        cap = min(byte_cap, B // 2) if B >= 2 else 1
        bt = _largest_divisor(B, max(1, cap))
        vmem_limit = int(min(vmem_soft_cap, max(32 * _MIB, 10 * bt * slab_bytes)))
        out3 = _domain_norm2_fused(x3, w2, b2, bt, vmem_limit)

    return out3.reshape(B, C, H, W)


# --------------------------------------------------------------------------
# Pure-JAX reference of DomainNorm2.forward (l2=True)
# --------------------------------------------------------------------------
def _reference(x, weight, bias):
    mean = jnp.mean(x, axis=(2, 3), keepdims=True)
    var = jnp.mean((x - mean) ** 2, axis=(2, 3), keepdims=True)
    xn = (x - mean) / jnp.sqrt(var + _IN_EPS)
    norm = jnp.sqrt(jnp.sum(xn * xn, axis=1, keepdims=True))
    xl = xn / jnp.maximum(norm, _L2_EPS)
    return xl * weight + bias


if __name__ == "__main__":
    key = jax.random.PRNGKey(0)
    k1, k2, k3 = jax.random.split(key, 3)

    B, C = 2, 4
    # Deterministic, non-trivial per-channel affine params (module init is
    # ones/zeros; use a spread so the scale/shift path is actually exercised).
    weight = jnp.linspace(0.5, 1.5, C, dtype=jnp.float32).reshape(1, C, 1, 1)
    bias = jnp.linspace(-0.2, 0.2, C, dtype=jnp.float32).reshape(1, C, 1, 1)

    def _check(out, ref, name):
        assert out.shape == ref.shape and out.dtype == ref.dtype, name
        assert jnp.allclose(out, ref, atol=2e-5, rtol=1e-4), name

    # 1) Fused single-pass path (the path real small shapes take).
    x = jax.random.normal(k1, (B, C, 16, 16), dtype=jnp.float32)
    ref = _reference(x, weight, bias)
    out = domain_norm2(x, weight, bias)
    jax.block_until_ready(out)
    _check(out, ref, "fused path mismatch")

    # 2) Two-phase tiled path, forced with a 128-lane tile: HW=256 -> T=2,
    #    exercising the two-super-chunk (parallel) stats grid.
    out_tiled = domain_norm2(x, weight, bias, force_tiled=True, hw_tile=128)
    jax.block_until_ready(out_tiled)
    _check(out_tiled, ref, "tiled path mismatch")

    # 3) Ragged spatial extent: HW=240 is not a multiple of the 128-lane tile,
    #    exercising the masked stats tail and dropped OOB output columns.
    xr = jax.random.normal(k2, (B, C, 12, 20), dtype=jnp.float32)
    refr = _reference(xr, weight, bias)
    outr = domain_norm2(xr, weight, bias, force_tiled=True, hw_tile=128)
    jax.block_until_ready(outr)
    _check(outr, refr, "ragged tiled path mismatch")

    # 4) Odd tile count (HW=320 -> T=3): single super-chunk with a multi-step
    #    scratch accumulation (reset / accumulate / flush) plus a ragged tail.
    xo = jax.random.normal(k3, (B, C, 20, 16), dtype=jnp.float32)
    refo = _reference(xo, weight, bias)
    outo = domain_norm2(xo, weight, bias, force_tiled=True, hw_tile=128)
    jax.block_until_ready(outo)
    _check(outo, refo, "odd-tile-count tiled path mismatch")

    print("KERNEL_OK")
</pallas_src>

<mosaic_0001>
module attributes {stable_mosaic.version = 11 : i64} {
  func.func @_fused_kernel(%arg0: i32, %arg1: memref<1x4x256xf32, #tpu.memory_space<vmem>>, %arg2: memref<4x1xf32, #tpu.memory_space<vmem>>, %arg3: memref<4x1xf32, #tpu.memory_space<vmem>>, %arg4: memref<1x4x256xf32, #tpu.memory_space<vmem>>) attributes {dimension_semantics = [#tpu.dimension_semantics<parallel>], iteration_bounds = array<i64: 2>, scalar_prefetch = 0 : i64, scratch_operands = 0 : i64, tpu.core_type = #tpu.core_type<tc>, window_params = [{transform_indices = @transform_0, window_bounds = array<i64: 1, 4, 256>}, {pipeline_mode = #tpu.pipeline_mode<synchronous>, transform_indices = @transform_1, window_bounds = array<i64: 4, 1>}, {pipeline_mode = #tpu.pipeline_mode<synchronous>, transform_indices = @transform_2, window_bounds = array<i64: 4, 1>}, {transform_indices = @transform_3, window_bounds = array<i64: 1, 4, 256>}]} {
    %c0 = arith.constant 0 : index
    %c0_0 = arith.constant 0 : index
    %c0_1 = arith.constant 0 : index
    %0 = vector.load %arg1[%c0, %c0_0, %c0_1] : memref<1x4x256xf32, #tpu.memory_space<vmem>>, vector<1x4x256xf32>
    %cst = arith.constant dense<0.000000e+00> : vector<1x4xf32>
    %1 = vector.multi_reduction <add>, %0, %cst [2] : vector<1x4x256xf32> to vector<1x4xf32>
    %2 = vector.shape_cast %1 : vector<1x4xf32> to vector<1x4x1xf32>
    %cst_2 = arith.constant 3.906250e-03 : f32
    %3 = vector.broadcast %cst_2 : f32 to vector<1x4x1xf32>
    %4 = arith.mulf %2, %3 : vector<1x4x1xf32>
    %5 = vector.broadcast %4 : vector<1x4x1xf32> to vector<1x4x256xf32>
    %6 = arith.subf %0, %5 : vector<1x4x256xf32>
    %7 = arith.mulf %6, %6 : vector<1x4x256xf32>
    %cst_3 = arith.constant dense<0.000000e+00> : vector<1x4xf32>
    %8 = vector.multi_reduction <add>, %7, %cst_3 [2] : vector<1x4x256xf32> to vector<1x4xf32>
    %9 = vector.shape_cast %8 : vector<1x4xf32> to vector<1x4x1xf32>
    %cst_4 = arith.constant 3.906250e-03 : f32
    %10 = vector.broadcast %cst_4 : f32 to vector<1x4x1xf32>
    %11 = arith.mulf %9, %10 : vector<1x4x1xf32>
    %cst_5 = arith.constant 9.99999974E-6 : f32
    %12 = vector.broadcast %cst_5 : f32 to vector<1x4x1xf32>
    %13 = arith.addf %11, %12 : vector<1x4x1xf32>
    %14 = math.rsqrt %13 : vector<1x4x1xf32>
    %15 = arith.mulf %14, %14 : vector<1x4x1xf32>
    %16 = vector.broadcast %15 : vector<1x4x1xf32> to vector<1x4x256xf32>
    %17 = arith.mulf %7, %16 : vector<1x4x256xf32>
    %cst_6 = arith.constant dense<0.000000e+00> : vector<1x256xf32>
    %18 = vector.multi_reduction <add>, %17, %cst_6 [1] : vector<1x4x256xf32> to vector<1x256xf32>
    %19 = vector.shape_cast %18 : vector<1x256xf32> to vector<1x1x256xf32>
    %cst_7 = arith.constant 1.000000e-24 : f32
    %20 = vector.broadcast %cst_7 : f32 to vector<1x1x256xf32>
    %21 = arith.maximumf %19, %20 : vector<1x1x256xf32>
    %22 = math.rsqrt %21 : vector<1x1x256xf32>
    %c0_8 = arith.constant 0 : index
    %c0_9 = arith.constant 0 : index
    %23 = vector.load %arg2[%c0_8, %c0_9] : memref<4x1xf32, #tpu.memory_space<vmem>>, vector<4x1xf32>
    %24 = vector.shape_cast %23 : vector<4x1xf32> to vector<1x4x1xf32>
    %c0_10 = arith.constant 0 : index
    %c0_11 = arith.constant 0 : index
    %25 = vector.load %arg3[%c0_10, %c0_11] : memref<4x1xf32, #tpu.memory_space<vmem>>, vector<4x1xf32>
    %26 = vector.shape_cast %25 : vector<4x1xf32> to vector<1x4x1xf32>
    %27 = arith.mulf %14, %24 : vector<1x4x1xf32>
    %28 = vector.broadcast %27 : vector<1x4x1xf32> to vector<1x4x256xf32>
    %29 = arith.mulf %6, %28 : vector<1x4x256xf32>
    %30 = vector.broadcast %22 : vector<1x1x256xf32> to vector<1x4x256xf32>
    %31 = arith.mulf %29, %30 : vector<1x4x256xf32>
    %32 = vector.broadcast %26 : vector<1x4x1xf32> to vector<1x4x256xf32>
    %33 = arith.addf %31, %32 : vector<1x4x256xf32>
    %c0_12 = arith.constant 0 : index
    %c0_13 = arith.constant 0 : index
    %c0_14 = arith.constant 0 : index
    %34 = vector.load %arg4[%c0_12, %c0_13, %c0_14] : memref<1x4x256xf32, #tpu.memory_space<vmem>>, vector<1x4x256xf32>
    tpu.vector_store %arg4[%c0_12, %c0_13, %c0_14], %33 {strides = array<i32>} : memref<1x4x256xf32, #tpu.memory_space<vmem>>, vector<1x4x256xf32>,
    return
  }
  func.func @transform_0(%arg0: i32) -> (i32, i32, i32) {
    %c0_i32 = arith.constant 0 : i32
    %c0_i32_0 = arith.constant 0 : i32
    %c0_i32_1 = arith.constant 0 : i32
    return %arg0, %c0_i32, %c0_i32_0 : i32, i32, i32
  }
  func.func @transform_1(%arg0: i32) -> (i32, i32) {
    %c0_i32 = arith.constant 0 : i32
    %c0_i32_0 = arith.constant 0 : i32
    %c0_i32_1 = arith.constant 0 : i32
    return %c0_i32, %c0_i32_0 : i32, i32
  }
  func.func @transform_2(%arg0: i32) -> (i32, i32) {
    %c0_i32 = arith.constant 0 : i32
    %c0_i32_0 = arith.constant 0 : i32
    %c0_i32_1 = arith.constant 0 : i32
    return %c0_i32, %c0_i32_0 : i32, i32
  }
  func.func @transform_3(%arg0: i32) -> (i32, i32, i32) {
    %c0_i32 = arith.constant 0 : i32
    %c0_i32_0 = arith.constant 0 : i32
    %c0_i32_1 = arith.constant 0 : i32
    return %arg0, %c0_i32, %c0_i32_0 : i32, i32, i32
  }
}

</mosaic_0001>

<llo_original>
// kernel: tpu_custom_call.1
$region0: #{tpu_custom_call.1}
  #allocation0 [shape = 'u32[]', space=smem, size = 0x4, offset = 0x4, fixed_abs, tag = 'smem constant byte address 0x4 - core index']
  #allocation1 [shape = 'u32[72,128]{1,0:T(1,128)}', space=vmem, size = 0x9000, scoped, tag = 'internal scratch']
  %s0 = inlined_call_operand.hbm [shape: f32[2,4,256], index: 0, kind: input, shape index: {}]
  %s1 = inlined_call_operand.vmem [shape: f32[4,1], index: 1, kind: input, shape index: {}]
  %s2 = inlined_call_operand.vmem [shape: f32[4,1], index: 2, kind: input, shape index: {}]
  %s3 = inlined_call_operand.hbm [shape: f32[2,4,256], index: 3, kind: output, shape index: {}]
  %s4 = sld [smem:[#allocation0]]
  $region49: #{tpu_custom_call.1} parent=0
    _
  %s6 = ssub.s32 1, %s4
  %s7 = scalar_select 0, %s6, %s4
  $region1: #{tpu_custom_call.1} parent=0
    #allocation2 [shape = 'u8[8192]{0}', space=vmem, size = 0x2000, scoped, tag = 'input window, operand 0']
    #allocation3 [shape = 's32[2]{0}', space=sflag, size = 0x8, scoped, tag = 'scoped memory for tpu_custom_call.1']
    #allocation4 [shape = 's32[2]{0}', space=sflag, size = 0x8, scoped, tag = 'scoped memory for tpu_custom_call.1']
    #allocation5 [shape = 'u8[8192]{0}', space=vmem, size = 0x2000, scoped, tag = 'output window, operand 0']
    %8 = vsyncpa [#allocation3], 0
    %s9 = scalar_lea.sflag [#allocation3], 1
    %10 = vsyncpa %s9, 0
    %11 = vsyncpa [#allocation4], 0
    %s12 = scalar_lea.sflag [#allocation4], 1
    %13 = vsyncpa %s12, 0
    loop: start=0, step=1, limit=4
    $region2: #{tpu_custom_call.1} parent=1 // loop_pre_header
      _
    $region3: #{tpu_custom_call.1} parent=1 // loop_header
      %s15 = sphi 0, %s19
      %p16 = scmp.ge.s32.totalorder %s15, 4
      %s25 = sphi 0, %s27
      %s28 = sphi 0, %s25
      %s29 = sphi 0, %s28
      %s45 = sphi 0, %s29
      %s49 = sphi 0, %s49
      %s51 = sphi 0, %s49
      %s52 = sphi 0, %s51
      %s66 = sphi 0, %s52
      %s70 = sphi 0, %s70
      %s72 = sphi 0, %s70
      %s73 = sphi 0, %s72
      %s87 = sphi 0, %s73
      %s93 = sphi 0, %s95
      %s96 = sphi 0, %s93
      %s97 = sphi 0, %s96
      %s113 = sphi 0, %s97
    $region4: #{tpu_custom_call.1} parent=1 // loop_header_branch
      %18 = sbr.rel (%p16) target = $region8
    $region5: #{tpu_custom_call.1} parent=1 // loop_body
      %s20 = ssub.s32 %s15, 1
      %s21 = ssub.s32 %s15, 2
      %s22 = sadd.s32 %s15, 1
      %s23 = ssub.s32 %s15, %s22
      %p24 = scmp.eq.s32.totalorder %s23, 0
      %s26 = sadd.s32 %s25, 1
      %s27 = scalar_select %p24, %s25, %s26
      %p30 = pneg %p24
      %p31 = scmp.eq.s32.totalorder %s15, 1
      %p32 = por %p30, %p31
      %p33 = scmp.ne.s32.totalorder %s25, %s28
      %p34 = scmp.eq.s32.totalorder %s15, 0
      %p35 = por %p33, %p34
      %p36 = scmp.ne.s32.totalorder %s25, %s28
      %p37 = scmp.eq.s32.totalorder %s20, 1
      %p38 = por %p36, %p37
      %p39 = scmp.ne.s32.totalorder %s28, %s29
      %p40 = scmp.eq.s32.totalorder %s20, 0
      %p41 = por %p39, %p40
      %p42 = scmp.ne.s32.totalorder %s28, %s29
      %p43 = scmp.eq.s32.totalorder %s21, 1
      %p44 = por %p42, %p43
      %p46 = scmp.ne.s32.totalorder %s29, %s45
      %p47 = scmp.eq.s32.totalorder %s21, 0
      %p48 = por %p46, %p47
      %s50 = sadd.s32 %s49, 1
      %p53 = scmp.eq.s32.totalorder %s15, 1
      %p54 = scmp.ne.s32.totalorder %s49, %s51
      %p55 = scmp.eq.s32.totalorder %s15, 0
      %p56 = por %p54, %p55
      %p57 = scmp.ne.s32.totalorder %s49, %s51
      %p58 = scmp.eq.s32.totalorder %s20, 1
      %p59 = por %p57, %p58
      %p60 = scmp.ne.s32.totalorder %s51, %s52
      %p61 = scmp.eq.s32.totalorder %s20, 0
      %p62 = por %p60, %p61
      %p63 = scmp.ne.s32.totalorder %s51, %s52
      %p64 = scmp.eq.s32.totalorder %s21, 1
      %p65 = por %p63, %p64
      %p67 = scmp.ne.s32.totalorder %s52, %s66
      %p68 = scmp.eq.s32.totalorder %s21, 0
      %p69 = por %p67, %p68
      %s71 = sadd.s32 %s70, 1
      %p74 = scmp.eq.s32.totalorder %s15, 1
      %p75 = scmp.ne.s32.totalorder %s70, %s72
      %p76 = scmp.eq.s32.totalorder %s15, 0
      %p77 = por %p75, %p76
      %p78 = scmp.ne.s32.totalorder %s70, %s72
      %p79 = scmp.eq.s32.totalorder %s20, 1
      %p80 = por %p78, %p79
      %p81 = scmp.ne.s32.totalorder %s72, %s73
      %p82 = scmp.eq.s32.totalorder %s20, 0
      %p83 = por %p81, %p82
      %p84 = scmp.ne.s32.totalorder %s72, %s73
      %p85 = scmp.eq.s32.totalorder %s21, 1
      %p86 = por %p84, %p85
      %p88 = scmp.ne.s32.totalorder %s73, %s87
      %p89 = scmp.eq.s32.totalorder %s21, 0
      %p90 = por %p88, %p89
      %s91 = ssub.s32 %s15, %s22
      %p92 = scmp.eq.s32.totalorder %s91, 0
      %s94 = sadd.s32 %s93, 1
      %s95 = scalar_select %p92, %s93, %s94
      %p98 = pneg %p92
      %p99 = scmp.eq.s32.totalorder %s15, 1
      %p100 = por %p98, %p99
      %p101 = scmp.ne.s32.totalorder %s93, %s96
      %p102 = scmp.eq.s32.totalorder %s15, 0
      %p103 = por %p101, %p102
      %p104 = scmp.ne.s32.totalorder %s93, %s96
      %p105 = scmp.eq.s32.totalorder %s20, 1
      %p106 = por %p104, %p105
      %p107 = scmp.ne.s32.totalorder %s96, %s97
      %p108 = scmp.eq.s32.totalorder %s20, 0
      %p109 = por %p107, %p108
      %p110 = scmp.ne.s32.totalorder %s96, %s97
      %p111 = scmp.eq.s32.totalorder %s21, 1
      %p112 = por %p110, %p111
      %p114 = scmp.ne.s32.totalorder %s97, %s113
      %p115 = scmp.eq.s32.totalorder %s21, 0
      %p116 = por %p114, %p115
      %p117 = scmp.le.s32.totalorder 1, %s15
      %p118 = scmp.lt.s32.totalorder %s15, 3
      %p119 = pnand %p117, %p118
      %p120 = pneg %p119
      // Predicated region
      $region9: #{tpu_custom_call.1} parent=5 // pred_check
        _
      $region10: #{tpu_custom_call.1} parent=5 // pred_check_branch
        %122 = sbr.rel (%p119) target = $region12
      $region11: #{tpu_custom_call.1} parent=5 // pred_region
        %s123 = ssub.s32 %s15, 1
        // Predicated region
        $region13: #{tpu_custom_call.1} parent=11 // pred_check
          %p124 = pneg %p62
        $region14: #{tpu_custom_call.1} parent=11 // pred_check_branch
          %126 = sbr.rel (%p124) target = $region16
        $region15: #{tpu_custom_call.1} parent=11 // pred_region
          _
        $region16: #{tpu_custom_call.1} parent=11 // pred_fallthru
          _
        // Predicated region
        $region17: #{tpu_custom_call.1} parent=11 // pred_check
          %p127 = pneg %p83
        $region18: #{tpu_custom_call.1} parent=11 // pred_check_branch
          %129 = sbr.rel (%p127) target = $region20
        $region19: #{tpu_custom_call.1} parent=11 // pred_region
          _
        $region20: #{tpu_custom_call.1} parent=11 // pred_fallthru
          _
      $region12: #{tpu_custom_call.1} parent=5 // pred_fallthru
        _
      %p130 = scmp.lt.s32.totalorder %s15, 2
      // Predicated region
      $region21: #{tpu_custom_call.1} parent=5 // pred_check
        %p131 = pneg %p130
      $region22: #{tpu_custom_call.1} parent=5 // pred_check_branch
        %133 = sbr.rel (%p131) target = $region24
      $region23: #{tpu_custom_call.1} parent=5 // pred_region
        // Predicated region
        $region25: #{tpu_custom_call.1} parent=23 // pred_check
          %p134 = pneg %p35
        $region26: #{tpu_custom_call.1} parent=23 // pred_check_branch
          %136 = sbr.rel (%p134) target = $region28
        $region27: #{tpu_custom_call.1} parent=23 // pred_region
          %s137 = sand.u32 %s25, 1
          %s138 = scalar_lea.sflag [#allocation3], %s137
          %s139 = sand.u32 %s25, 1
          %s140 = smul.addr %s139, 8
          %s141 = scalar_lea.vmem [#allocation2], %s140
          %143 = vsyncadd %s138, 0
          %s144 = smul.addr %s15, 2
          %s145 = smul.addr %s144, 4
          %s146 = scalar_lea.hbm %s0, %s145
          %s148 = sshll.u32 %s146, 4
          %s149 = int_to_ptr.hbm [resolvable:$true] %s148
          %s150 = sshll.u32 %s141, 4
          %s151 = int_to_ptr.vmem [resolvable:$true] %s150
          %153 = dma.hbm_to_vmem [thread:$0]  %s149, 128, %s151, %s138
        $region28: #{tpu_custom_call.1} parent=23 // pred_fallthru
          _
      $region24: #{tpu_custom_call.1} parent=5 // pred_fallthru
        _
      %p154 = scmp.le.s32.totalorder 1, %s15
      %p155 = scmp.lt.s32.totalorder %s15, 3
      %p156 = pnand %p154, %p155
      %p157 = pneg %p156
      // Predicated region
      $region29: #{tpu_custom_call.1} parent=5 // pred_check
        _
      $region30: #{tpu_custom_call.1} parent=5 // pred_check_branch
        %159 = sbr.rel (%p156) target = $region32
      $region31: #{tpu_custom_call.1} parent=5 // pred_region
        %s160 = ssub.s32 %s15, 1
        %s161 = sand.u32 %s28, 1
        %s162 = scalar_lea.sflag [#allocation3], %s161
        %s163 = sand.u32 %s28, 1
        %s164 = smul.addr %s163, 8
        %s165 = scalar_lea.vmem [#allocation2], %s164
        // Predicated region
        $region33: #{tpu_custom_call.1} parent=31 // pred_check
          %p166 = pneg %p41
        $region34: #{tpu_custom_call.1} parent=31 // pred_check_branch
          %168 = sbr.rel (%p166) target = $region36
        $region35: #{tpu_custom_call.1} parent=31 // pred_region
          %170 = dma.done %s162, 128
        $region36: #{tpu_custom_call.1} parent=31 // pred_fallthru
          _
        %s171 = sand.u32 %s28, 1
        %s172 = scalar_lea.sflag [#allocation3], %s171
        %s173 = sand.u32 %s28, 1
        %s174 = smul.addr %s173, 8
        %s175 = scalar_lea.vmem [#allocation2], %s174
        %p176 = pneg %p41
        %p177 = pneg %p38
        %p178 = pneg %p62
        %p179 = pneg %p59
        %p180 = pneg %p83
        %p181 = pneg %p80
        %p182 = pneg %p109
        %p183 = pneg %p106
        %s184 = sand.u32 %s96, 1
        %s185 = scalar_lea.sflag [#allocation4], %s184
        %s186 = sand.u32 %s96, 1
        %s187 = smul.addr %s186, 8
        %s188 = scalar_lea.vmem [#allocation5], %s187
        %v189 = vld [vmem:[%s165] sm:$0xff]
        %191 = vst [vmem:[#allocation1] ss:$2 sm:$0xff] %v189
        %v192 = vld.sshfl [vmem:[#allocation1] sm:$0xff pattern:$0x75316420]
        %v193 = vld.sshfl [vmem:[#allocation1 + $0x8] sm:$0xff pattern:$0x75316420]
        %vm196 = vcmask 1043456
        %v197 = vsel %vm196, %v192, 0.0
        %v198 = vsel %vm196, %v193, 0.0
        %v199 = vadd.f32 %v197, %v198
        %200 = vadd.xlane.f32.xlu0 %v199
        %v201 = vpop.xlane.xlu0 %200
        %v202 = vmul.f32 %v201, 0.00390625
        %v205 = vunpack.c.l.s4 839922192
        %v206 = vunpack.c.0.s8 %v205
        %v207 = vperm.slane %v202, %v206
        %v209 = vsub.f32 %v189, %v207
        %v210 = vmul.f32 %v209, %v209
        %212 = vst [vmem:[#allocation1] ss:$2 sm:$0xff] %v210
        %v213 = vld.sshfl [vmem:[#allocation1] sm:$0xff pattern:$0x75316420]
        %v214 = vld.sshfl [vmem:[#allocation1 + $0x8] sm:$0xff pattern:$0x75316420]
        %v217 = vsel %vm196, %v213, 0.0
        %v218 = vsel %vm196, %v214, 0.0
        %v219 = vadd.f32 %v217, %v218
        %220 = vadd.xlane.f32.xlu0 %v219
        %v221 = vpop.xlane.xlu0 %220
        %v222 = vmul.f32 %v221, 0.00390625
        %v223 = vadd.f32 %v222, 1e-05
        %v224 = vrsqrt.pop %v223
        %v225 = vmul.f32 %v224, %v223
        %v226 = vmul.f32 %v225, %v224
        %v227 = vmul.f32 0.5, %v226
        %v228 = vsub.f32 1.5, %v227
        %v229 = vmul.f32 %v224, %v228
        %vm230 = vweird.f32 %v223
        %vm231 = vweird.f32 %v224
        %vm232 = vmor %vm230, %vm231
        %v233 = vsel %vm232, %v224, %v229
        %v234 = vmul.f32 %v233, %v233
        %v237 = vunpack.c.l.s4 839922192
        %v238 = vunpack.c.0.s8 %v237
        %v239 = vperm.slane %v234, %v238
        %v241 = vmul.f32 %v210, %v239
        %243 = vst [vmem:[#allocation1] ss:$2 sm:$0xff] %v241
        %v244 = vld.sshfl [vmem:[#allocation1] sm:$0xff pattern:$0x75316420]
        %v245 = vld.sshfl [vmem:[#allocation1 + $0x8] sm:$0xff pattern:$0x75316420]
        %v248 = vsel %vm196, %v244, 0.0
        %v249 = vrot.slane %v248, 4
        %v250 = vadd.f32 %v248, %v249
        %v251 = vrot.slane %v250, 2
        %v252 = vadd.f32 %v250, %v251
        %v253 = vrot.slane %v252, 1
        %v254 = vadd.f32 %v252, %v253
        %v255 = vsel %vm196, %v245, 0.0
        %v256 = vrot.slane %v255, 4
        %v257 = vadd.f32 %v255, %v256
        %v258 = vrot.slane %v257, 2
        %v259 = vadd.f32 %v257, %v258
        %v260 = vrot.slane %v259, 1
        %v261 = vadd.f32 %v259, %v260
        %v262 = vmax.f32 %v254, 1e-24
        %v263 = vmax.f32 %v261, 1e-24
        %v264 = vrsqrt.pop %v262
        %v265 = vmul.f32 %v264, %v262
        %v266 = vmul.f32 %v265, %v264
        %v267 = vmul.f32 0.5, %v266
        %v268 = vsub.f32 1.5, %v267
        %v269 = vmul.f32 %v264, %v268
        %vm270 = vweird.f32 %v262
        %vm271 = vweird.f32 %v264
        %vm272 = vmor %vm270, %vm271
        %v273 = vsel %vm272, %v264, %v269
        %v274 = vrsqrt.pop %v263
        %v275 = vmul.f32 %v274, %v263
        %v276 = vmul.f32 %v275, %v274
        %v277 = vmul.f32 0.5, %v276
        %v278 = vsub.f32 1.5, %v277
        %v279 = vmul.f32 %v274, %v278
        %vm280 = vweird.f32 %v263
        %vm281 = vweird.f32 %v274
        %vm282 = vmor %vm280, %vm281
        %v283 = vsel %vm282, %v274, %v279
        %v284 = vld [vmem:[%s1] sm:$0xf]
        %v285 = vld [vmem:[%s2] sm:$0xf]
        %v286 = vmul.f32 %v233, %v284
        %288 = vset.pattern.permute.xlu0 0
        %289 = vperm.xlu0 %288, %v286
        %v290 = vpop.permute.xlu0 %289
        %v292 = vunpack.c.l.s4 839922192
        %v293 = vunpack.c.0.s8 %v292
        %v294 = vperm.slane %v290, %v293
        %v296 = vmul.f32 %v209, %v294
        %v299 = vrot.slane %v283, 4
        %v300 = vsel %vm196, %v273, %v299
        %v302 = vmul.f32 %v296, %v300
        %304 = vset.pattern.permute.xlu0 0
        %305 = vperm.xlu0 %304, %v285
        %v306 = vpop.permute.xlu0 %305
        %v308 = vunpack.c.l.s4 839922192
        %v309 = vunpack.c.0.s8 %v308
        %v310 = vperm.slane %v306, %v309
        %v312 = vadd.f32 %v302, %v310
        %313 = vst [vmem:[%s188] sm:$0xff] %v312
        %s314 = sand.u32 %s96, 1
        %s315 = scalar_lea.sflag [#allocation4], %s314
        %s316 = sand.u32 %s96, 1
        %s317 = smul.addr %s316, 8
        %s318 = scalar_lea.vmem [#allocation5], %s317
        // Predicated region
        $region37: #{tpu_custom_call.1} parent=31 // pred_check
          %p319 = pneg %p106
        $region38: #{tpu_custom_call.1} parent=31 // pred_check_branch
          %321 = sbr.rel (%p319) target = $region40
        $region39: #{tpu_custom_call.1} parent=31 // pred_region
          %323 = vsyncadd %s315, 0
          %s324 = smul.addr %s20, 2
          %s325 = smul.addr %s324, 4
          %s326 = scalar_lea.hbm %s3, %s325
          %s328 = sshll.u32 %s318, 4
          %s329 = int_to_ptr.vmem [resolvable:$true] %s328
          %s330 = sshll.u32 %s326, 4
          %s331 = int_to_ptr.hbm [resolvable:$true] %s330
          %333 = dma.vmem_to_hbm [thread:$0]  %s329, 128, %s331, %s315
        $region40: #{tpu_custom_call.1} parent=31 // pred_fallthru
          _
      $region32: #{tpu_custom_call.1} parent=5 // pred_fallthru
        _
      %p334 = scmp.le.s32.totalorder 2, %s15
      // Predicated region
      $region41: #{tpu_custom_call.1} parent=5 // pred_check
        %p335 = pneg %p334
      $region42: #{tpu_custom_call.1} parent=5 // pred_check_branch
        %337 = sbr.rel (%p335) target = $region44
      $region43: #{tpu_custom_call.1} parent=5 // pred_region
        %s338 = ssub.s32 %s15, 2
        // Predicated region
        $region45: #{tpu_custom_call.1} parent=43 // pred_check
          %p339 = pneg %p112
        $region46: #{tpu_custom_call.1} parent=43 // pred_check_branch
          %341 = sbr.rel (%p339) target = $region48
        $region47: #{tpu_custom_call.1} parent=43 // pred_region
          %s342 = sand.u32 %s97, 1
          %s343 = scalar_lea.sflag [#allocation4], %s342
          %s344 = sand.u32 %s97, 1
          %s345 = smul.addr %s344, 8
          %s346 = scalar_lea.vmem [#allocation5], %s345
          %348 = dma.done %s343, 128
        $region48: #{tpu_custom_call.1} parent=43 // pred_fallthru
          _
      $region44: #{tpu_custom_call.1} parent=5 // pred_fallthru
        _
    $region6: #{tpu_custom_call.1} parent=1 // loop_footer
      %s19 = sadd.s32 1, %s15
    $region7: #{tpu_custom_call.1} parent=1 // loop_footer_branch
      %14 = sbr.rel target = $region3
    $region8: #{tpu_custom_call.1} parent=1 // loop_exit
      _
    %349 = vsyncpa [#allocation3], 1
    %s350 = scalar_lea.sflag [#allocation3], 1
    %351 = vsyncpa %s350, 1
    %352 = vsyncpa [#allocation4], 1
    %s353 = scalar_lea.sflag [#allocation4], 1
    %354 = vsyncpa %s353, 1

</llo_original>
